<compile_context>
chip_gen: v7x
topology: tpu7x:2x2x1
jax: 0.10.0
libtpu: 0.0.40
codegen_flags: <defaults>
</compile_context>

<pallas_src>
import jax
import jax.numpy as jnp
from jax.experimental import pallas as pl
from jax.experimental.pallas import tpu as pltpu


def _round_up(a, b):
    return (a + b - 1) // b * b


def _itemsize(dt):
    return jnp.dtype(dt).itemsize


# ----------------------------------------------------------------- kernels ---

def _resident_kernel(x_ref, w6_ref, b6_ref, w7_ref, b7_ref, o_ref):
    """Fully-resident w6: one fused fc6->ReLU->fc7->ReLU per batch tile."""
    h = jnp.dot(x_ref[...], w6_ref[...], preferred_element_type=jnp.float32)
    h = h + b6_ref[...].astype(jnp.float32)
    h = jnp.maximum(h, 0.0).astype(w7_ref.dtype)                 # ReLU(fc6)
    o = jnp.dot(h, w7_ref[...], preferred_element_type=jnp.float32)
    o = o + b7_ref[...].astype(jnp.float32)
    o_ref[...] = jnp.maximum(o, 0.0).astype(o_ref.dtype)         # ReLU(fc7)


def _ktiled_kernel(x_ref, w6_ref, b6_ref, w7_ref, b7_ref, o_ref, acc_ref):
    """K-tiled fc6 reduction with resident f32 accumulator; fc7 in the epilogue."""
    k = pl.program_id(1)

    @pl.when(k == 0)
    def _init():
        # Fold the fc6 bias into the (required) accumulator init.
        acc_ref[...] = jnp.broadcast_to(
            b6_ref[...].astype(jnp.float32), acc_ref.shape)

    acc_ref[...] += jnp.dot(x_ref[...], w6_ref[...],
                            preferred_element_type=jnp.float32)

    @pl.when(k == pl.num_programs(1) - 1)
    def _finalize():
        h = jnp.maximum(acc_ref[...], 0.0).astype(w7_ref.dtype)  # ReLU(fc6)
        o = jnp.dot(h, w7_ref[...], preferred_element_type=jnp.float32)
        o = o + b7_ref[...].astype(jnp.float32)
        o_ref[...] = jnp.maximum(o, 0.0).astype(o_ref.dtype)     # ReLU(fc7)


# ---------------------------------------------------------------- wrappers ---

def prepare_params(w6, b6, w7, b7, compute_dtype=jnp.bfloat16):
    """Hoist the per-call weight cast / bias reshape out of the hot path.

    Call once at module init and reuse the result for every forward pass.
    """
    rep = w7.shape[0]
    return (jnp.asarray(w6, compute_dtype),
            jnp.asarray(b6, jnp.float32).reshape(1, rep),
            jnp.asarray(w7, compute_dtype),
            jnp.asarray(b7, jnp.float32).reshape(1, rep))


def _choose_batch_tile(n, resident):
    n8 = _round_up(max(n, 1), 8)
    if n8 <= 256:
        return n8
    # 256-aligned (full-width v6e/v7x MXU passes); >=2 tiles for large N so the
    # "parallel" batch axis megacore-shards on v7x.  In the K-tiled fallback a
    # bigger tile (512) cuts w6 re-streaming proportionally.
    return 256 if resident else 512


def _choose_k_tile(in_features, max_k_tile):
    """Return (k_tile, padded_K), preferring tiles that divide in_features
    exactly (no padded weight copy) and are 256-aligned for the MXU."""
    if in_features <= max_k_tile:
        return in_features, in_features
    for align in (256, 128):
        t = (max_k_tile // align) * align
        while t >= align:
            if in_features % t == 0:
                return t, in_features
            t -= align
    t = min(max_k_tile, _round_up(in_features, 128))
    return t, _round_up(in_features, t)


def two_mlp_head_prepared(x, params, *, batch_tile=None, max_k_tile=1792,
                          resident_weight_budget_bytes=40 * 1024 * 1024,
                          out_dtype=None, vmem_limit_bytes=None):
    """x: (N, C, H, W).  params = prepare_params(...).  Returns (N, rep)."""
    w6, b6_2d, w7, b7_2d = params
    compute_dtype = w6.dtype

    n = x.shape[0]
    in_features = 1
    for d in x.shape[1:]:
        in_features *= int(d)
    assert w6.shape[0] == in_features, (w6.shape, in_features)
    rep = w6.shape[1]
    if out_dtype is None:
        out_dtype = x.dtype
    out_isz = _itemsize(out_dtype)
    cmp_isz = _itemsize(compute_dtype)

    weight_bytes = w6.size * cmp_isz + w7.size * cmp_isz
    resident = weight_bytes <= resident_weight_budget_bytes

    if batch_tile is None:
        batch_tile = _choose_batch_tile(n, resident)

    # flatten(start_dim=1) — row-major, matches torch.
    x2d = x.reshape(n, in_features).astype(compute_dtype)

    n_pad = _round_up(max(n, 1), batch_tile)

    if resident:
        # ------------------------------------------------ resident-w6 path ---
        if n_pad != n:
            x2d = jnp.pad(x2d, ((0, n_pad - n), (0, 0)))

        if vmem_limit_bytes is None:
            need = (weight_bytes + 2 * rep * 4                       # weights + biases
                    + 2 * batch_tile * in_features * cmp_isz         # x, double-buffered
                    + 2 * batch_tile * rep * out_isz                 # out, double-buffered
                    + (6 << 20))                                     # slack
            vmem_limit_bytes = min(int(need), 120 << 20)

        grid = (n_pad // batch_tile,)
        out = pl.pallas_call(
            _resident_kernel,
            out_shape=jax.ShapeDtypeStruct((n_pad, rep), out_dtype),
            grid_spec=pltpu.PrefetchScalarGridSpec(
                num_scalar_prefetch=0,
                grid=grid,
                in_specs=[
                    pl.BlockSpec((batch_tile, in_features), lambda i: (i, 0)),
                    # Constant-index weights/biases: fetched once, single-buffered.
                    pl.BlockSpec((in_features, rep), lambda i: (0, 0),
                                 pipeline_mode=pl.Buffered(1)),
                    pl.BlockSpec((1, rep), lambda i: (0, 0),
                                 pipeline_mode=pl.Buffered(1)),
                    pl.BlockSpec((rep, rep), lambda i: (0, 0),
                                 pipeline_mode=pl.Buffered(1)),
                    pl.BlockSpec((1, rep), lambda i: (0, 0),
                                 pipeline_mode=pl.Buffered(1)),
                ],
                out_specs=pl.BlockSpec((batch_tile, rep), lambda i: (i, 0)),
            ),
            compiler_params=pltpu.CompilerParams(
                dimension_semantics=("parallel",),
                vmem_limit_bytes=vmem_limit_bytes,
            ),
        )(x2d, w6, b6_2d, w7, b7_2d)
        return out[:n]

    # ---------------------------------------------------- K-tiled fallback ---
    k_tile, k_pad = _choose_k_tile(in_features, max_k_tile)

    x2d = jnp.pad(x2d, ((0, n_pad - n), (0, k_pad - in_features)))
    w6_p = w6 if k_pad == in_features else jnp.pad(
        w6, ((0, k_pad - in_features), (0, 0)))

    if vmem_limit_bytes is None:
        need = (2 * batch_tile * k_tile * cmp_isz        # x tiles, double-buffered
                + 2 * k_tile * rep * cmp_isz             # w6 tiles, double-buffered
                + rep * rep * cmp_isz + 2 * rep * 4      # w7 + biases (Buffered(1))
                + batch_tile * rep * 4                   # f32 accumulator
                + 2 * batch_tile * rep * out_isz         # out, double-buffered
                + (6 << 20))
        vmem_limit_bytes = min(int(need), 120 << 20)

    grid = (n_pad // batch_tile, k_pad // k_tile)
    out = pl.pallas_call(
        _ktiled_kernel,
        out_shape=jax.ShapeDtypeStruct((n_pad, rep), out_dtype),
        grid_spec=pltpu.PrefetchScalarGridSpec(
            num_scalar_prefetch=0,
            grid=grid,
            in_specs=[
                pl.BlockSpec((batch_tile, k_tile), lambda i, k: (i, k)),
                pl.BlockSpec((k_tile, rep), lambda i, k: (k, 0)),
                pl.BlockSpec((1, rep), lambda i, k: (0, 0),
                             pipeline_mode=pl.Buffered(1)),
                pl.BlockSpec((rep, rep), lambda i, k: (0, 0),
                             pipeline_mode=pl.Buffered(1)),
                pl.BlockSpec((1, rep), lambda i, k: (0, 0),
                             pipeline_mode=pl.Buffered(1)),
            ],
            out_specs=pl.BlockSpec((batch_tile, rep), lambda i, k: (i, 0)),
            scratch_shapes=[pltpu.VMEM((batch_tile, rep), jnp.float32)],
        ),
        compiler_params=pltpu.CompilerParams(
            dimension_semantics=("parallel", "arbitrary"),
            vmem_limit_bytes=vmem_limit_bytes,
        ),
    )(x2d, w6_p, b6_2d, w7, b7_2d)
    return out[:n]


def two_mlp_head(x, w6, b6, w7, b7, *, compute_dtype=jnp.bfloat16, **kw):
    """Convenience wrapper (casts weights per call — for repeated inference use
    prepare_params() once and two_mlp_head_prepared())."""
    return two_mlp_head_prepared(
        x, prepare_params(w6, b6, w7, b7, compute_dtype), **kw)


# -------------------------------------------------------------- references ---

def reference_f32(x, w6, b6, w7, b7):
    x2d = x.reshape(x.shape[0], -1)
    h = jnp.maximum(x2d @ w6 + b6, 0.0)
    return jnp.maximum(h @ w7 + b7, 0.0)


def reference_bf16(x, w6, b6, w7, b7):
    # Same bf16-operand / f32-accumulate recipe the kernel uses.
    x2d = x.reshape(x.shape[0], -1).astype(jnp.bfloat16)
    h = jnp.dot(x2d, w6.astype(jnp.bfloat16),
                preferred_element_type=jnp.float32) + b6
    h = jnp.maximum(h, 0.0).astype(jnp.bfloat16)
    o = jnp.dot(h, w7.astype(jnp.bfloat16),
                preferred_element_type=jnp.float32) + b7
    return jnp.maximum(o, 0.0)


def _make_inputs(key, N, C, H, W, rep):
    in_features = C * H * W
    kx, k6w, k6b, k7w, k7b = jax.random.split(key, 5)
    x = jax.random.normal(kx, (N, C, H, W), dtype=jnp.float32)
    bound6 = 1.0 / (in_features ** 0.5)
    bound7 = 1.0 / (rep ** 0.5)
    w6 = jax.random.uniform(k6w, (in_features, rep), jnp.float32, -bound6, bound6)
    b6 = jax.random.uniform(k6b, (rep,), jnp.float32, -bound6, bound6)
    w7 = jax.random.uniform(k7w, (rep, rep), jnp.float32, -bound7, bound7)
    b7 = jax.random.uniform(k7b, (rep,), jnp.float32, -bound7, bound7)
    return x, w6, b6, w7, b7


if __name__ == "__main__":
    key = jax.random.PRNGKey(0)
    k1, k2 = jax.random.split(key)

    # --- Test 1: small shape, resident-w6 path -------------------------------
    # (N, C, H, W) = (8, 4, 4, 4) -> in_features = 64, representation_size = 128
    x, w6, b6, w7, b7 = _make_inputs(k1, 8, 4, 4, 4, 128)
    params = prepare_params(w6, b6, w7, b7)          # hoisted weight prep
    out = two_mlp_head_prepared(x, params)
    out = jax.block_until_ready(out)
    assert out.shape == (8, 128), out.shape
    ref_bf = reference_bf16(x, w6, b6, w7, b7)
    assert jnp.allclose(out, ref_bf, atol=1e-2, rtol=1e-2), float(
        jnp.max(jnp.abs(out - ref_bf)))
    ref32 = reference_f32(x, w6, b6, w7, b7)
    assert jnp.allclose(out, ref32, atol=5e-2, rtol=5e-2), float(
        jnp.max(jnp.abs(out - ref32)))

    # --- Test 2: small shape, forced K-tiled path (2 K steps) ----------------
    x2, w62, b62, w72, b72 = _make_inputs(k2, 16, 8, 8, 8, 128)   # in_features=512
    params2 = prepare_params(w62, b62, w72, b72)
    out2 = two_mlp_head_prepared(x2, params2, max_k_tile=256,
                                 resident_weight_budget_bytes=0)
    out2 = jax.block_until_ready(out2)
    assert out2.shape == (16, 128), out2.shape
    ref_bf2 = reference_bf16(x2, w62, b62, w72, b72)
    assert jnp.allclose(out2, ref_bf2, atol=2e-2, rtol=2e-2), float(
        jnp.max(jnp.abs(out2 - ref_bf2)))
    ref322 = reference_f32(x2, w62, b62, w72, b72)
    assert jnp.allclose(out2, ref322, atol=1e-1, rtol=5e-2), float(
        jnp.max(jnp.abs(out2 - ref322)))

    print("KERNEL_OK")
</pallas_src>

<mosaic_0001>
module attributes {stable_mosaic.version = 11 : i64} {
  func.func @_resident_kernel(%arg0: i32, %arg1: memref<8x64xbf16, #tpu.memory_space<vmem>>, %arg2: memref<64x128xbf16, #tpu.memory_space<vmem>>, %arg3: memref<1x128xf32, #tpu.memory_space<vmem>>, %arg4: memref<128x128xbf16, #tpu.memory_space<vmem>>, %arg5: memref<1x128xf32, #tpu.memory_space<vmem>>, %arg6: memref<8x128xf32, #tpu.memory_space<vmem>>) attributes {dimension_semantics = [#tpu.dimension_semantics<parallel>], iteration_bounds = array<i64: 1>, scalar_prefetch = 0 : i64, scratch_operands = 0 : i64, tpu.core_type = #tpu.core_type<tc>, window_params = [{transform_indices = @transform_0, window_bounds = array<i64: 8, 64>}, {pipeline_mode = #tpu.pipeline_mode<synchronous>, transform_indices = @transform_1, window_bounds = array<i64: 64, 128>}, {pipeline_mode = #tpu.pipeline_mode<synchronous>, transform_indices = @transform_2, window_bounds = array<i64: 1, 128>}, {pipeline_mode = #tpu.pipeline_mode<synchronous>, transform_indices = @transform_3, window_bounds = array<i64: 128, 128>}, {pipeline_mode = #tpu.pipeline_mode<synchronous>, transform_indices = @transform_4, window_bounds = array<i64: 1, 128>}, {transform_indices = @transform_5, window_bounds = array<i64: 8, 128>}]} {
    %c0 = arith.constant 0 : index
    %c0_0 = arith.constant 0 : index
    %0 = vector.load %arg1[%c0, %c0_0] : memref<8x64xbf16, #tpu.memory_space<vmem>>, vector<8x64xbf16>
    %c0_1 = arith.constant 0 : index
    %c0_2 = arith.constant 0 : index
    %1 = vector.load %arg2[%c0_1, %c0_2] : memref<64x128xbf16, #tpu.memory_space<vmem>>, vector<64x128xbf16>
    %cst = arith.constant dense<0.000000e+00> : vector<8x128xf32>
    %2 = tpu.matmul %0, %1, %cst {dimension_numbers = #tpu.dot_dimension_numbers<[1], [0], [0], [1], [0, 0, 1, 1], [], []>} : vector<8x64xbf16>, vector<64x128xbf16>, vector<8x128xf32> -> vector<8x128xf32>
    %c0_3 = arith.constant 0 : index
    %c0_4 = arith.constant 0 : index
    %3 = vector.load %arg3[%c0_3, %c0_4] : memref<1x128xf32, #tpu.memory_space<vmem>>, vector<1x128xf32>
    %4 = vector.broadcast %3 : vector<1x128xf32> to vector<8x128xf32>
    %5 = arith.addf %2, %4 : vector<8x128xf32>
    %cst_5 = arith.constant 0.000000e+00 : f32
    %6 = vector.broadcast %cst_5 : f32 to vector<8x128xf32>
    %7 = arith.maximumf %5, %6 : vector<8x128xf32>
    %8 = arith.truncf %7 : vector<8x128xf32> to vector<8x128xbf16>
    %c0_6 = arith.constant 0 : index
    %c0_7 = arith.constant 0 : index
    %9 = vector.load %arg4[%c0_6, %c0_7] : memref<128x128xbf16, #tpu.memory_space<vmem>>, vector<128x128xbf16>
    %cst_8 = arith.constant dense<0.000000e+00> : vector<8x128xf32>
    %10 = tpu.matmul %8, %9, %cst_8 {dimension_numbers = #tpu.dot_dimension_numbers<[1], [0], [0], [1], [0, 0, 1, 1], [], []>} : vector<8x128xbf16>, vector<128x128xbf16>, vector<8x128xf32> -> vector<8x128xf32>
    %c0_9 = arith.constant 0 : index
    %c0_10 = arith.constant 0 : index
    %11 = vector.load %arg5[%c0_9, %c0_10] : memref<1x128xf32, #tpu.memory_space<vmem>>, vector<1x128xf32>
    %12 = vector.broadcast %11 : vector<1x128xf32> to vector<8x128xf32>
    %13 = arith.addf %10, %12 : vector<8x128xf32>
    %cst_11 = arith.constant 0.000000e+00 : f32
    %14 = vector.broadcast %cst_11 : f32 to vector<8x128xf32>
    %15 = arith.maximumf %13, %14 : vector<8x128xf32>
    %c0_12 = arith.constant 0 : index
    %c0_13 = arith.constant 0 : index
    %16 = vector.load %arg6[%c0_12, %c0_13] : memref<8x128xf32, #tpu.memory_space<vmem>>, vector<8x128xf32>
    tpu.vector_store %arg6[%c0_12, %c0_13], %15 {strides = array<i32>} : memref<8x128xf32, #tpu.memory_space<vmem>>, vector<8x128xf32>,
    return
  }
  func.func @transform_0(%arg0: i32) -> (i32, i32) {
    %c0_i32 = arith.constant 0 : i32
    %c0_i32_0 = arith.constant 0 : i32
    return %arg0, %c0_i32 : i32, i32
  }
  func.func @transform_1(%arg0: i32) -> (i32, i32) {
    %c0_i32 = arith.constant 0 : i32
    %c0_i32_0 = arith.constant 0 : i32
    %c0_i32_1 = arith.constant 0 : i32
    return %c0_i32, %c0_i32_0 : i32, i32
  }
  func.func @transform_2(%arg0: i32) -> (i32, i32) {
    %c0_i32 = arith.constant 0 : i32
    %c0_i32_0 = arith.constant 0 : i32
    %c0_i32_1 = arith.constant 0 : i32
    return %c0_i32, %c0_i32_0 : i32, i32
  }
  func.func @transform_3(%arg0: i32) -> (i32, i32) {
    %c0_i32 = arith.constant 0 : i32
    %c0_i32_0 = arith.constant 0 : i32
    %c0_i32_1 = arith.constant 0 : i32
    return %c0_i32, %c0_i32_0 : i32, i32
  }
  func.func @transform_4(%arg0: i32) -> (i32, i32) {
    %c0_i32 = arith.constant 0 : i32
    %c0_i32_0 = arith.constant 0 : i32
    %c0_i32_1 = arith.constant 0 : i32
    return %c0_i32, %c0_i32_0 : i32, i32
  }
  func.func @transform_5(%arg0: i32) -> (i32, i32) {
    %c0_i32 = arith.constant 0 : i32
    %c0_i32_0 = arith.constant 0 : i32
    return %arg0, %c0_i32 : i32, i32
  }
}

</mosaic_0001>

<llo_original>
// kernel: tpu_custom_call.1
$region0: #{tpu_custom_call.1}
  #allocation0 [shape = 'u32[]', space=smem, size = 0x4, offset = 0x4, fixed_abs, tag = 'smem constant byte address 0x4 - core index']
  #allocation1 [shape = 'u32[144,128]{1,0:T(1,128)}', space=vmem, size = 0x12000, scoped, tag = 'internal scratch']
  %s0 = inlined_call_operand.hbm [shape: bf16[8,64], index: 0, kind: input, shape index: {}]
  %s1 = inlined_call_operand.hbm [shape: bf16[64,128], index: 1, kind: input, shape index: {}]
  %s2 = inlined_call_operand.vmem [shape: f32[1,128], index: 2, kind: input, shape index: {}]
  %s3 = inlined_call_operand.hbm [shape: bf16[128,128], index: 3, kind: input, shape index: {}]
  %s4 = inlined_call_operand.vmem [shape: f32[1,128], index: 4, kind: input, shape index: {}]
  %s5 = inlined_call_operand.hbm [shape: f32[8,128], index: 5, kind: output, shape index: {}]
  %s6 = sld [smem:[#allocation0]]
  $region42: #{tpu_custom_call.1} parent=0
    _
  %s8 = ssub.s32 1, %s6
  %s9 = scalar_select 0, %s8, %s6
  $region1: #{tpu_custom_call.1} parent=0
    #allocation2 [shape = 'u8[2048]{0}', space=vmem, size = 0x800, scoped, tag = 'input window, operand 0, single buffered']
    #allocation3 [shape = 's32[1]{0}', space=sflag, size = 0x4, scoped, tag = 'scoped memory for tpu_custom_call.1']
    #allocation4 [shape = 's32[1]{0}', space=sflag, size = 0x4, scoped, tag = 'scoped memory for tpu_custom_call.1']
    #allocation5 [shape = 'u8[16384]{0}', space=vmem, size = 0x4000, scoped, tag = 'input window, operand 1, single buffered']
    #allocation6 [shape = 's32[1]{0}', space=sflag, size = 0x4, scoped, tag = 'scoped memory for tpu_custom_call.1']
    #allocation7 [shape = 'u8[32768]{0}', space=vmem, size = 0x8000, scoped, tag = 'input window, operand 3, single buffered']
    #allocation8 [shape = 'u8[4096]{0}', space=vmem, size = 0x1000, scoped, tag = 'output window, operand 0, single buffered']
    %10 = vsyncpa [#allocation3], 0
    %11 = vsyncpa [#allocation6], 0
    %12 = vsyncpa [#allocation4], 0
    // Predicated region
    $region2: #{tpu_custom_call.1} parent=1 // pred_check
      _
    $region3: #{tpu_custom_call.1} parent=1 // pred_check_branch
      %14 = sbr.rel (0) target = $region5
    $region4: #{tpu_custom_call.1} parent=1 // pred_region
      %s16 = ssub.s32 64, 64
      %17 = vsyncadd [#allocation3], %s16
      %s19 = sshll.u32 [#allocation2], 4
      %s20 = int_to_ptr.vmem [resolvable:$true] %s19
      %22 = dma.hbm_to_vmem [thread:$0]  %s0, 64, %s20, [#allocation3]
    $region5: #{tpu_custom_call.1} parent=1 // pred_fallthru
      _
    // Predicated region
    $region6: #{tpu_custom_call.1} parent=1 // pred_check
      _
    $region7: #{tpu_custom_call.1} parent=1 // pred_check_branch
      %24 = sbr.rel (0) target = $region9
    $region8: #{tpu_custom_call.1} parent=1 // pred_region
      %s26 = ssub.s32 512, 512
      %27 = vsyncadd [#allocation6], %s26
      %s28 = sshll.u32 [#allocation5], 4
      %s29 = int_to_ptr.vmem [resolvable:$true] %s28
      %34 = dma.hbm_to_vmem [thread:$0]  %s1, 512, %s29, [#allocation6], 64, 64, 4
    $region9: #{tpu_custom_call.1} parent=1 // pred_fallthru
      _
    // Predicated region
    $region10: #{tpu_custom_call.1} parent=1 // pred_check
      _
    $region11: #{tpu_custom_call.1} parent=1 // pred_check_branch
      %36 = sbr.rel (0) target = $region13
    $region12: #{tpu_custom_call.1} parent=1 // pred_region
      _
    $region13: #{tpu_custom_call.1} parent=1 // pred_fallthru
      _
    // Predicated region
    $region14: #{tpu_custom_call.1} parent=1 // pred_check
      _
    $region15: #{tpu_custom_call.1} parent=1 // pred_check_branch
      %38 = sbr.rel (0) target = $region17
    $region16: #{tpu_custom_call.1} parent=1 // pred_region
      %s40 = ssub.s32 1024, 1024
      %41 = vsyncadd [#allocation6], %s40
      %s42 = sshll.u32 [#allocation7], 4
      %s43 = int_to_ptr.vmem [resolvable:$true] %s42
      %48 = dma.hbm_to_vmem [thread:$0]  %s3, 1024, %s43, [#allocation6], 64, 64, 4
    $region17: #{tpu_custom_call.1} parent=1 // pred_fallthru
      _
    // Predicated region
    $region18: #{tpu_custom_call.1} parent=1 // pred_check
      _
    $region19: #{tpu_custom_call.1} parent=1 // pred_check_branch
      %50 = sbr.rel (0) target = $region21
    $region20: #{tpu_custom_call.1} parent=1 // pred_region
      _
    $region21: #{tpu_custom_call.1} parent=1 // pred_fallthru
      _
    // Predicated region
    $region22: #{tpu_custom_call.1} parent=1 // pred_check
      _
    $region23: #{tpu_custom_call.1} parent=1 // pred_check_branch
      %52 = sbr.rel (0) target = $region25
    $region24: #{tpu_custom_call.1} parent=1 // pred_region
      %53 = dma.done [#allocation3], 64
    $region25: #{tpu_custom_call.1} parent=1 // pred_fallthru
      _
    // Predicated region
    $region26: #{tpu_custom_call.1} parent=1 // pred_check
      _
    $region27: #{tpu_custom_call.1} parent=1 // pred_check_branch
      %55 = sbr.rel (0) target = $region29
    $region28: #{tpu_custom_call.1} parent=1 // pred_region
      %56 = dma.done [#allocation6], 512
    $region29: #{tpu_custom_call.1} parent=1 // pred_fallthru
      _
    // Predicated region
    $region30: #{tpu_custom_call.1} parent=1 // pred_check
      _
    $region31: #{tpu_custom_call.1} parent=1 // pred_check_branch
      %58 = sbr.rel (0) target = $region33
    $region32: #{tpu_custom_call.1} parent=1 // pred_region
      %59 = dma.done [#allocation6], 1024
    $region33: #{tpu_custom_call.1} parent=1 // pred_fallthru
      _
    %v61 = vld [vmem:[#allocation2] sm:$0xf]
    %v62 = vld [vmem:[#allocation5] sm:$0xf]
    %v63 = vld [vmem:[#allocation5 + $0x4] sm:$0xf]
    %v64 = vld [vmem:[#allocation5 + $0x8] sm:$0xf]
    %v65 = vld [vmem:[#allocation5 + $0xc] sm:$0xf]
    %v66 = vld [vmem:[#allocation5 + $0x10] sm:$0xf]
    %v67 = vld [vmem:[#allocation5 + $0x14] sm:$0xf]
    %v68 = vld [vmem:[#allocation5 + $0x18] sm:$0xf]
    %v69 = vld [vmem:[#allocation5 + $0x1c] sm:$0xf]
    %v70 = vld [vmem:[%s2] sm:$0x1]
    %v72 = vlaneseq
    %v73 = vshrl.u32 %v72, 7
    %v74 = vsub.s32 0, %v73
    %v75 = vrot.slane %v70, %v74
    %v85 = vunpack.c.l.b16 %v62
    %v86 = vunpack.c.l.b16 %v63
    %v87 = vunpack.c.l.b16 %v64
    %v88 = vunpack.c.l.b16 %v65
    %v89 = vunpack.c.l.b16 %v66
    %v90 = vunpack.c.l.b16 %v67
    %v91 = vunpack.c.l.b16 %v68
    %v92 = vunpack.c.l.b16 %v69
    %v93 = vpack.c.b16 %v86, %v85
    %v94 = vpack.c.b16 %v88, %v87
    %v95 = vpack.c.b16 %v90, %v89
    %v96 = vpack.c.b16 %v92, %v91
    %vm101 = vcmask 523264
    %v103 = vsel %vm101, %v61, 0
    %105 = vmatprep.subr.bf16.mxu0 0
    %106 = vmatpush1.bf16.msra.mxu0 %v93
    %107 = vmatprep.subr.bf16.mxu0 0
    %108 = vmatpush1.bf16.msra.mxu0 %v94
    %109 = vmatprep.subr.bf16.mxu0 0
    %110 = vmatpush1.bf16.msra.mxu0 %v95
    %111 = vmatprep.subr.bf16.mxu0 0
    %112 = vmatpush1.bf16.msra.mxu0 %v96
    %113 = vmatprep.subr.bf16.mxu0 0
    %114 = vmatpush1.bf16.msra.mxu0 0
    %115 = vmatprep.subr.bf16.mxu0 0
    %116 = vmatpush1.bf16.msra.mxu0 0
    %117 = vmatprep.subr.bf16.mxu0 0
    %118 = vmatpush1.bf16.msra.mxu0 0
    %119 = vmatprep.subr.bf16.mxu0 0
    %120 = vmatpush1.bf16.msra.mxu0 0
    %121 = vmatprep.subr.bf16.mxu0 0
    %122 = vmatpush1.bf16.msra.mxu0 0
    %123 = vmatprep.subr.bf16.mxu0 0
    %124 = vmatpush1.bf16.msra.mxu0 0
    %125 = vmatprep.subr.bf16.mxu0 0
    %126 = vmatpush1.bf16.msra.mxu0 0
    %127 = vmatprep.subr.bf16.mxu0 0
    %128 = vmatpush1.bf16.msra.mxu0 0
    %129 = vmatprep.subr.bf16.mxu0 0
    %130 = vmatpush1.bf16.msra.mxu0 0
    %131 = vmatprep.subr.bf16.mxu0 0
    %132 = vmatpush1.bf16.msra.mxu0 0
    %133 = vmatprep.subr.bf16.mxu0 0
    %134 = vmatpush1.bf16.msra.mxu0 0
    %135 = vmatprep.subr.bf16.mxu0 0
    %136 = vmatpush1.bf16.msra.mxu0 0
    %137 = vmatprep.mubr.bf16.mxu0 0
    %138 = vmatmul.mubr.bf16.gmra.mrb[0].mxu0 %v103
    %v139 = vpop.f32.mrb[0].mxu0
    %v140 = vadd.f32 %v75, %v139
    %v141 = vpop.f32.mrb[0].mxu0
    %v142 = vpop.f32.mrb[0].mxu0
    %v143 = vpop.f32.mrb[0].mxu0
    %144 = vdwg.mxu0
    %v145 = vmax.f32 %v140, 0.0
    %v146 = vpack.c.bf16 %v145, %v145
    %v147 = vld [vmem:[#allocation7] sm:$0xf]
    %v148 = vld [vmem:[#allocation7 + $0x4] sm:$0xf]
    %v149 = vld [vmem:[#allocation7 + $0x8] sm:$0xf]
    %v150 = vld [vmem:[#allocation7 + $0xc] sm:$0xf]
    %v151 = vld [vmem:[#allocation7 + $0x10] sm:$0xf]
    %v152 = vld [vmem:[#allocation7 + $0x14] sm:$0xf]
    %v153 = vld [vmem:[#allocation7 + $0x18] sm:$0xf]
    %v154 = vld [vmem:[#allocation7 + $0x1c] sm:$0xf]
    %v155 = vld [vmem:[#allocation7 + $0x20] sm:$0xf]
    %v156 = vld [vmem:[#allocation7 + $0x24] sm:$0xf]
    %v157 = vld [vmem:[#allocation7 + $0x28] sm:$0xf]
    %v158 = vld [vmem:[#allocation7 + $0x2c] sm:$0xf]
    %v159 = vld [vmem:[#allocation7 + $0x30] sm:$0xf]
    %v160 = vld [vmem:[#allocation7 + $0x34] sm:$0xf]
    %v161 = vld [vmem:[#allocation7 + $0x38] sm:$0xf]
    %v162 = vld [vmem:[#allocation7 + $0x3c] sm:$0xf]
    %v163 = vld [vmem:[%s4] sm:$0x1]
    %v165 = vlaneseq
    %v166 = vshrl.u32 %v165, 7
    %v167 = vsub.s32 0, %v166
    %v168 = vrot.slane %v163, %v167
    %v186 = vunpack.c.l.b16 %v147
    %v187 = vunpack.c.l.b16 %v148
    %v188 = vunpack.c.l.b16 %v149
    %v189 = vunpack.c.l.b16 %v150
    %v190 = vunpack.c.l.b16 %v151
    %v191 = vunpack.c.l.b16 %v152
    %v192 = vunpack.c.l.b16 %v153
    %v193 = vunpack.c.l.b16 %v154
    %v194 = vunpack.c.l.b16 %v155
    %v195 = vunpack.c.l.b16 %v156
    %v196 = vunpack.c.l.b16 %v157
    %v197 = vunpack.c.l.b16 %v158
    %v198 = vunpack.c.l.b16 %v159
    %v199 = vunpack.c.l.b16 %v160
    %v200 = vunpack.c.l.b16 %v161
    %v201 = vunpack.c.l.b16 %v162
    %v202 = vpack.c.b16 %v187, %v186
    %v203 = vpack.c.b16 %v189, %v188
    %v204 = vpack.c.b16 %v191, %v190
    %v205 = vpack.c.b16 %v193, %v192
    %v206 = vpack.c.b16 %v195, %v194
    %v207 = vpack.c.b16 %v197, %v196
    %v208 = vpack.c.b16 %v199, %v198
    %v209 = vpack.c.b16 %v201, %v200
    %218 = vmatprep.subr.bf16.mxu0 0
    %219 = vmatpush1.bf16.msra.mxu0 %v202
    %220 = vmatprep.subr.bf16.mxu0 0
    %221 = vmatpush1.bf16.msra.mxu0 %v203
    %222 = vmatprep.subr.bf16.mxu0 0
    %223 = vmatpush1.bf16.msra.mxu0 %v204
    %224 = vmatprep.subr.bf16.mxu0 0
    %225 = vmatpush1.bf16.msra.mxu0 %v205
    %226 = vmatprep.subr.bf16.mxu0 0
    %227 = vmatpush1.bf16.msra.mxu0 %v206
    %228 = vmatprep.subr.bf16.mxu0 0
    %229 = vmatpush1.bf16.msra.mxu0 %v207
    %230 = vmatprep.subr.bf16.mxu0 0
    %231 = vmatpush1.bf16.msra.mxu0 %v208
    %232 = vmatprep.subr.bf16.mxu0 0
    %233 = vmatpush1.bf16.msra.mxu0 %v209
    %234 = vmatprep.subr.bf16.mxu0 0
    %235 = vmatpush1.bf16.msra.mxu0 0
    %236 = vmatprep.subr.bf16.mxu0 0
    %237 = vmatpush1.bf16.msra.mxu0 0
    %238 = vmatprep.subr.bf16.mxu0 0
    %239 = vmatpush1.bf16.msra.mxu0 0
    %240 = vmatprep.subr.bf16.mxu0 0
    %241 = vmatpush1.bf16.msra.mxu0 0
    %242 = vmatprep.subr.bf16.mxu0 0
    %243 = vmatpush1.bf16.msra.mxu0 0
    %244 = vmatprep.subr.bf16.mxu0 0
    %245 = vmatpush1.bf16.msra.mxu0 0
    %246 = vmatprep.subr.bf16.mxu0 0
    %247 = vmatpush1.bf16.msra.mxu0 0
    %248 = vmatprep.subr.bf16.mxu0 0
    %249 = vmatpush1.bf16.msra.mxu0 0
    %250 = vmatprep.mubr.bf16.mxu0 0
    %251 = vmatmul.mubr.bf16.gmra.mrb[0].mxu0 %v146
    %v252 = vpop.f32.mrb[0].mxu0
    %v253 = vadd.f32 %v168, %v252
    %v254 = vpop.f32.mrb[0].mxu0
    %v255 = vpop.f32.mrb[0].mxu0
    %v256 = vpop.f32.mrb[0].mxu0
    %257 = vdwg.mxu0
    %v258 = vmax.f32 %v253, 0.0
    %259 = vst [vmem:[#allocation8] sm:$0xff] %v258
    // Predicated region
    $region34: #{tpu_custom_call.1} parent=1 // pred_check
      _
    $region35: #{tpu_custom_call.1} parent=1 // pred_check_branch
      %261 = sbr.rel (0) target = $region37
    $region36: #{tpu_custom_call.1} parent=1 // pred_region
      %s263 = ssub.s32 128, 128
      %264 = vsyncadd [#allocation4], %s263
      %s266 = sshll.u32 [#allocation8], 4
      %s267 = int_to_ptr.vmem [resolvable:$true] %s266
      %269 = dma.vmem_to_hbm [thread:$0]  %s267, 128, %s5, [#allocation4]
    $region37: #{tpu_custom_call.1} parent=1 // pred_fallthru
      _
    // Predicated region
    $region38: #{tpu_custom_call.1} parent=1 // pred_check
      _
    $region39: #{tpu_custom_call.1} parent=1 // pred_check_branch
      %271 = sbr.rel (0) target = $region41
    $region40: #{tpu_custom_call.1} parent=1 // pred_region
      %272 = dma.done [#allocation4], 128
    $region41: #{tpu_custom_call.1} parent=1 // pred_fallthru
      _
    %273 = vsyncpa [#allocation3], 1
    %274 = vsyncpa [#allocation6], 1
    %275 = vsyncpa [#allocation4], 1

</llo_original>
